<compile_context>
chip_gen: v7x
topology: tpu7x:2x2x1
jax: 0.10.0
libtpu: 0.0.40
codegen_flags: <defaults>
</compile_context>

<pallas_src>
import functools

import jax
import jax.numpy as jnp
import numpy as np
from jax.experimental import pallas as pl
from jax.experimental.pallas import tpu as pltpu

_NEG = -1e30  # class-axis pad value; finite, so no inf-inf NaN, exp(s*_NEG)=0


def _ldam_kernel(x_ref, tgt_ref, wt_ref, m_ref, num_ref, den_ref,
                 num_acc, den_acc, *, s):
    t = pl.program_id(1)

    # Zero this partition's per-row accumulators on its first batch tile.
    @pl.when(t == 0)
    def _():
        num_acc[...] = jnp.zeros_like(num_acc)
        den_acc[...] = jnp.zeros_like(den_acc)

    x = x_ref[...].astype(jnp.float32)          # (TB, CP); bf16 streamed, cast here
    tgt = tgt_ref[...]                          # (TB, 1) int32; -1 marks padded rows
    w_t = wt_ref[...]                           # (TB, 1) f32; weight[target] (0 on pad)
    m = m_ref[...].astype(jnp.float32)          # (1, CP)

    tb, cp = x.shape
    # (1, CP) iota; the compare broadcasts against tgt -> (TB, CP) predicate.
    cls = jax.lax.broadcasted_iota(jnp.int32, (1, cp), 1)
    hit = cls == tgt                            # one-hot as a predicate

    # Fused margin: shifted = where(onehot, x - m, x).  The target logit is the
    # masked reduce of the *same* array, so no separate batch_m / x_t reduces.
    shifted = x - jnp.where(hit, m, 0.0)                                      # (TB, CP)
    target_term = jnp.sum(jnp.where(hit, shifted, 0.0), axis=1, keepdims=True)  # (TB, 1)

    logits = s * shifted
    mx = jnp.max(logits, axis=1, keepdims=True)
    lse = jnp.log(jnp.sum(jnp.exp(logits - mx), axis=1, keepdims=True)) + mx
    nll = lse - s * target_term                                               # (TB, 1)

    # Elementwise per-row accumulation; the sublane reduce happens once below.
    num_acc[...] += nll * w_t
    den_acc[...] += w_t

    @pl.when(t == pl.num_programs(1) - 1)
    def _():
        num_ref[...] = jnp.broadcast_to(jnp.sum(num_acc[...]), num_ref.shape)
        den_ref[...] = jnp.broadcast_to(jnp.sum(den_acc[...]), den_ref.shape)


def ldam_loss(x, target, m_list, weight=None, s=30.0, tile_b=None,
              num_partitions=1, core_parallel=False):
    """LDAM loss forward.  x: (B, C) f32/bf16, target: (B,) int, m_list: (C,)."""
    B, C = x.shape
    itemsize = x.dtype.itemsize
    C_pad = max(128, ((C + 127) // 128) * 128)            # lane-dense class axis
    row_align = max(8, 32 // itemsize)                    # f32 -> 8, bf16 -> 16 sublanes

    b_cap = ((B + row_align - 1) // row_align) * row_align
    if tile_b is None:
        # ~6 MiB of x per block; with double-buffering + in-kernel f32
        # temporaries (~4-5x the block) this stays under the 48 MiB
        # vmem_limit_bytes set below on every generation (v7x physical = 64 MiB).
        target_bytes = 6 << 20
        rows = max(row_align, (target_bytes // (C_pad * itemsize)) // row_align * row_align)
        tile_b = min(rows, b_cap)
    else:
        tile_b = max(row_align, ((tile_b + row_align - 1) // row_align) * row_align)

    num_tiles = -(-B // tile_b)
    num_partitions = max(1, min(num_partitions, num_tiles))
    tiles_per_part = -(-num_tiles // num_partitions)
    B_pad = num_partitions * tiles_per_part * tile_b

    # Class-axis pad: large finite negative so padded lanes vanish from the
    # max / logsumexp with no in-kernel mask.  Batch-row pad: zeros (finite!),
    # target=-1, w_t=0, so padded rows contribute exactly 0.
    x_p = jnp.pad(x, ((0, 0), (0, C_pad - C)), constant_values=_NEG) if C_pad > C else x
    if B_pad > B:
        x_p = jnp.pad(x_p, ((0, B_pad - B), (0, 0)))

    tgt_i = target.astype(jnp.int32)
    tgt_p = jnp.pad(tgt_i.reshape(B, 1), ((0, B_pad - B), (0, 0)), constant_values=-1)

    # Per-row weight sideband: weight[target] (or 1.0), zero on padded rows.
    if weight is not None:
        w_rows = weight.astype(jnp.float32)[tgt_i]
    else:
        w_rows = jnp.ones((B,), jnp.float32)
    wt_p = jnp.pad(w_rows.reshape(B, 1), ((0, B_pad - B), (0, 0)))

    m_p = jnp.pad(m_list.astype(jnp.float32).reshape(1, C), ((0, 0), (0, C_pad - C)))

    in_specs = [
        pl.BlockSpec((tile_b, C_pad), lambda p, t: (p * tiles_per_part + t, 0)),
        pl.BlockSpec((tile_b, 1), lambda p, t: (p * tiles_per_part + t, 0)),
        pl.BlockSpec((tile_b, 1), lambda p, t: (p * tiles_per_part + t, 0)),
        pl.BlockSpec((1, C_pad), lambda p, t: (0, 0)),
    ]

    # One (8,128) accumulator block per partition (num / den), written once.
    out_shape = (jax.ShapeDtypeStruct((num_partitions, 8, 128), jnp.float32),
                 jax.ShapeDtypeStruct((num_partitions, 8, 128), jnp.float32))
    out_specs = (pl.BlockSpec((1, 8, 128), lambda p, t: (p, 0, 0)),
                 pl.BlockSpec((1, 8, 128), lambda p, t: (p, 0, 0)))

    if core_parallel and num_partitions > 1:
        # v7x: actually shard the partition axis across the two TensorCores.
        dim_sem = (pltpu.CORE_PARALLEL, pltpu.ARBITRARY)
    else:
        dim_sem = ("arbitrary", "arbitrary")

    # TODO(synk): for very large C (>~16k classes), add a class-tiled grid axis
    # with an online/streaming logsumexp instead of one (tile_b, C_pad) block.
    num, den = pl.pallas_call(
        functools.partial(_ldam_kernel, s=float(s)),
        grid=(num_partitions, tiles_per_part),
        in_specs=in_specs,
        out_specs=out_specs,
        out_shape=out_shape,
        scratch_shapes=[pltpu.VMEM((tile_b, 1), jnp.float32),
                        pltpu.VMEM((tile_b, 1), jnp.float32)],
        compiler_params=pltpu.CompilerParams(
            dimension_semantics=dim_sem,
            vmem_limit_bytes=48 << 20),
    )(x_p, tgt_p, wt_p, m_p)

    return jnp.sum(num[:, 0, 0]) / jnp.sum(den[:, 0, 0])


def make_m_list(cls_num_list, max_m=0.5):
    """Same margin formula as the PyTorch __init__."""
    m = 1.0 / np.sqrt(np.sqrt(np.asarray(cls_num_list, dtype=np.float64)))
    m = m * (max_m / np.max(m))
    return jnp.asarray(m, jnp.float32)


def _reference(x, target, m_list, s, weight=None):
    """Pure-JAX reference mirroring the PyTorch forward."""
    x = x.astype(jnp.float32)
    B, C = x.shape
    onehot = jax.nn.one_hot(target, C, dtype=jnp.float32)
    batch_m = onehot @ m_list.reshape(C, 1)
    out = jnp.where(onehot > 0, x - batch_m, x)
    logits = s * out
    logp = jax.nn.log_softmax(logits, axis=1)
    nll = -jnp.take_along_axis(logp, target.reshape(B, 1), axis=1)[:, 0]
    if weight is None:
        return jnp.mean(nll)
    w_t = weight[target]
    return jnp.sum(nll * w_t) / jnp.sum(w_t)


if __name__ == "__main__":
    key = jax.random.PRNGKey(0)
    B, C = 20, 16
    kx, kt = jax.random.split(key)
    x = jax.random.normal(kx, (B, C), jnp.float32)
    target = jax.random.randint(kt, (B,), 0, C, jnp.int32)

    cls_num_list = [50, 40, 30, 20, 15, 12, 10, 9, 8, 7, 6, 5, 4, 3, 2, 1]
    m_list = make_m_list(cls_num_list, max_m=0.5)
    s = 30.0

    # 1) unweighted, default tiling (single tile, single partition)
    loss = ldam_loss(x, target, m_list, weight=None, s=s)
    jax.block_until_ready(loss)
    ref = _reference(x, target, m_list, s)
    np.testing.assert_allclose(float(loss), float(ref), rtol=1e-4, atol=1e-4)

    # 2) weighted, forced multi-tile 2-partition grid (exercises padding,
    #    streaming accumulation and the per-partition writeback)
    weight = jnp.linspace(0.5, 1.5, C, dtype=jnp.float32)
    loss_w = ldam_loss(x, target, m_list, weight=weight, s=s,
                       tile_b=8, num_partitions=2)
    jax.block_until_ready(loss_w)
    ref_w = _reference(x, target, m_list, s, weight=weight)
    np.testing.assert_allclose(float(loss_w), float(ref_w), rtol=1e-4, atol=1e-4)

    # 3) bf16 activations streamed natively (half the HBM bytes), cast in-kernel
    x_bf16 = x.astype(jnp.bfloat16)
    loss_bf = ldam_loss(x_bf16, target, m_list, weight=None, s=s)
    jax.block_until_ready(loss_bf)
    ref_bf = _reference(x_bf16.astype(jnp.float32), target, m_list, s)
    np.testing.assert_allclose(float(loss_bf), float(ref_bf), rtol=1e-4, atol=1e-4)

    assert np.isfinite(float(loss))
    print("KERNEL_OK")
</pallas_src>

<mosaic_0001>
module attributes {stable_mosaic.version = 11 : i64} {
  func.func @_ldam_kernel(%arg0: i32, %arg1: i32, %arg2: memref<24x128xf32, #tpu.memory_space<vmem>>, %arg3: memref<24x1xi32, #tpu.memory_space<vmem>>, %arg4: memref<24x1xf32, #tpu.memory_space<vmem>>, %arg5: memref<1x128xf32, #tpu.memory_space<vmem>>, %arg6: memref<1x8x128xf32, #tpu.memory_space<vmem>>, %arg7: memref<1x8x128xf32, #tpu.memory_space<vmem>>, %arg8: memref<24x1xf32, #tpu.memory_space<vmem>>, %arg9: memref<24x1xf32, #tpu.memory_space<vmem>>) attributes {dimension_semantics = [#tpu.dimension_semantics<arbitrary>, #tpu.dimension_semantics<arbitrary>], iteration_bounds = array<i64: 1, 1>, scalar_prefetch = 0 : i64, scratch_operands = 2 : i64, tpu.core_type = #tpu.core_type<tc>, window_params = [{transform_indices = @transform_0, window_bounds = array<i64: 24, 128>}, {transform_indices = @transform_1, window_bounds = array<i64: 24, 1>}, {transform_indices = @transform_2, window_bounds = array<i64: 24, 1>}, {pipeline_mode = #tpu.pipeline_mode<synchronous>, transform_indices = @transform_3, window_bounds = array<i64: 1, 128>}, {transform_indices = @transform_4, window_bounds = array<i64: 1, 8, 128>}, {transform_indices = @transform_5, window_bounds = array<i64: 1, 8, 128>}]} {
    %c0_i32 = arith.constant 0 : i32
    %0 = arith.cmpi eq, %arg1, %c0_i32 : i32
    %1 = arith.extui %0 : i1 to i32
    %c0_i32_0 = arith.constant 0 : i32
    %2 = arith.cmpi ne, %1, %c0_i32_0 : i32
    scf.if %2 {
      %cst_24 = arith.constant 0.000000e+00 : f32
      %44 = vector.broadcast %cst_24 : f32 to vector<24x1xf32>
      %c0_25 = arith.constant 0 : index
      %c0_26 = arith.constant 0 : index
      %45 = vector.load %arg8[%c0_25, %c0_26] : memref<24x1xf32, #tpu.memory_space<vmem>>, vector<24x1xf32>
      tpu.vector_store %arg8[%c0_25, %c0_26], %44 {strides = array<i32>} : memref<24x1xf32, #tpu.memory_space<vmem>>, vector<24x1xf32>,
      %cst_27 = arith.constant 0.000000e+00 : f32
      %46 = vector.broadcast %cst_27 : f32 to vector<24x1xf32>
      %c0_28 = arith.constant 0 : index
      %c0_29 = arith.constant 0 : index
      %47 = vector.load %arg9[%c0_28, %c0_29] : memref<24x1xf32, #tpu.memory_space<vmem>>, vector<24x1xf32>
      tpu.vector_store %arg9[%c0_28, %c0_29], %46 {strides = array<i32>} : memref<24x1xf32, #tpu.memory_space<vmem>>, vector<24x1xf32>,
    } else {
    }
    %c0 = arith.constant 0 : index
    %c0_1 = arith.constant 0 : index
    %3 = vector.load %arg2[%c0, %c0_1] : memref<24x128xf32, #tpu.memory_space<vmem>>, vector<24x128xf32>
    %c0_2 = arith.constant 0 : index
    %c0_3 = arith.constant 0 : index
    %4 = vector.load %arg3[%c0_2, %c0_3] : memref<24x1xi32, #tpu.memory_space<vmem>>, vector<24x1xi32>
    %c0_4 = arith.constant 0 : index
    %c0_5 = arith.constant 0 : index
    %5 = vector.load %arg4[%c0_4, %c0_5] : memref<24x1xf32, #tpu.memory_space<vmem>>, vector<24x1xf32>
    %c0_6 = arith.constant 0 : index
    %c0_7 = arith.constant 0 : index
    %6 = vector.load %arg5[%c0_6, %c0_7] : memref<1x128xf32, #tpu.memory_space<vmem>>, vector<1x128xf32>
    %7 = tpu.iota {dimensions = array<i32: 1>} : vector<1x128xi32>
    %8 = vector.broadcast %7 : vector<1x128xi32> to vector<24x128xi32>
    %9 = vector.broadcast %4 : vector<24x1xi32> to vector<24x128xi32>
    %10 = arith.cmpi eq, %8, %9 : vector<24x128xi32>
    %cst = arith.constant 0.000000e+00 : f32
    %11 = vector.shape_cast %6 : vector<1x128xf32> to vector<1x128xf32>
    %12 = vector.broadcast %11 : vector<1x128xf32> to vector<24x128xf32>
    %13 = vector.broadcast %cst : f32 to vector<24x128xf32>
    %14 = arith.select %10, %12, %13 : vector<24x128xi1>, vector<24x128xf32>
    %15 = arith.subf %3, %14 : vector<24x128xf32>
    %cst_8 = arith.constant 0.000000e+00 : f32
    %16 = vector.broadcast %cst_8 : f32 to vector<24x128xf32>
    %17 = arith.select %10, %15, %16 : vector<24x128xi1>, vector<24x128xf32>
    %cst_9 = arith.constant dense<0.000000e+00> : vector<24xf32>
    %18 = vector.multi_reduction <add>, %17, %cst_9 [1] : vector<24x128xf32> to vector<24xf32>
    %19 = vector.shape_cast %18 : vector<24xf32> to vector<24x1xf32>
    %cst_10 = arith.constant 3.000000e+01 : f32
    %20 = vector.broadcast %cst_10 : f32 to vector<24x128xf32>
    %21 = arith.mulf %20, %15 : vector<24x128xf32>
    %cst_11 = arith.constant dense<0xFF800000> : vector<24xf32>
    %22 = vector.multi_reduction <maximumf>, %21, %cst_11 [1] : vector<24x128xf32> to vector<24xf32>
    %23 = vector.shape_cast %22 : vector<24xf32> to vector<24x1xf32>
    %24 = vector.broadcast %23 : vector<24x1xf32> to vector<24x128xf32>
    %25 = arith.subf %21, %24 : vector<24x128xf32>
    %26 = math.exp %25 : vector<24x128xf32>
    %cst_12 = arith.constant dense<0.000000e+00> : vector<24xf32>
    %27 = vector.multi_reduction <add>, %26, %cst_12 [1] : vector<24x128xf32> to vector<24xf32>
    %28 = vector.shape_cast %27 : vector<24xf32> to vector<24x1xf32>
    %29 = math.log %28 : vector<24x1xf32>
    %30 = arith.addf %29, %23 : vector<24x1xf32>
    %cst_13 = arith.constant 3.000000e+01 : f32
    %31 = vector.broadcast %cst_13 : f32 to vector<24x1xf32>
    %32 = arith.mulf %31, %19 : vector<24x1xf32>
    %33 = arith.subf %30, %32 : vector<24x1xf32>
    %c0_14 = arith.constant 0 : index
    %c0_15 = arith.constant 0 : index
    %34 = vector.load %arg8[%c0_14, %c0_15] : memref<24x1xf32, #tpu.memory_space<vmem>>, vector<24x1xf32>
    %35 = arith.mulf %33, %5 : vector<24x1xf32>
    %36 = arith.addf %34, %35 : vector<24x1xf32>
    %c0_16 = arith.constant 0 : index
    %c0_17 = arith.constant 0 : index
    %37 = vector.load %arg8[%c0_16, %c0_17] : memref<24x1xf32, #tpu.memory_space<vmem>>, vector<24x1xf32>
    tpu.vector_store %arg8[%c0_16, %c0_17], %36 {strides = array<i32>} : memref<24x1xf32, #tpu.memory_space<vmem>>, vector<24x1xf32>,
    %c0_18 = arith.constant 0 : index
    %c0_19 = arith.constant 0 : index
    %38 = vector.load %arg9[%c0_18, %c0_19] : memref<24x1xf32, #tpu.memory_space<vmem>>, vector<24x1xf32>
    %39 = arith.addf %38, %5 : vector<24x1xf32>
    %c0_20 = arith.constant 0 : index
    %c0_21 = arith.constant 0 : index
    %40 = vector.load %arg9[%c0_20, %c0_21] : memref<24x1xf32, #tpu.memory_space<vmem>>, vector<24x1xf32>
    tpu.vector_store %arg9[%c0_20, %c0_21], %39 {strides = array<i32>} : memref<24x1xf32, #tpu.memory_space<vmem>>, vector<24x1xf32>,
    %c0_i32_22 = arith.constant 0 : i32
    %41 = arith.cmpi eq, %arg1, %c0_i32_22 : i32
    %42 = arith.extui %41 : i1 to i32
    %c0_i32_23 = arith.constant 0 : i32
    %43 = arith.cmpi ne, %42, %c0_i32_23 : i32
    scf.if %43 {
      %c0_24 = arith.constant 0 : index
      %c0_25 = arith.constant 0 : index
      %44 = vector.load %arg8[%c0_24, %c0_25] : memref<24x1xf32, #tpu.memory_space<vmem>>, vector<24x1xf32>
      %45 = vector.shape_cast %44 : vector<24x1xf32> to vector<1x24x1xf32>
      %cst_26 = arith.constant dense<0.000000e+00> : vector<1xf32>
      %46 = vector.multi_reduction <add>, %45, %cst_26 [1, 2] : vector<1x24x1xf32> to vector<1xf32>
      %47 = vector.shape_cast %46 : vector<1xf32> to vector<1x1x1xf32>
      %48 = vector.extract %47[0, 0, 0] : f32 from vector<1x1x1xf32>
      %49 = vector.broadcast %48 : f32 to vector<1x8x128xf32>
      %c0_27 = arith.constant 0 : index
      %c0_28 = arith.constant 0 : index
      %c0_29 = arith.constant 0 : index
      %50 = vector.load %arg6[%c0_27, %c0_28, %c0_29] : memref<1x8x128xf32, #tpu.memory_space<vmem>>, vector<1x8x128xf32>
      tpu.vector_store %arg6[%c0_27, %c0_28, %c0_29], %49 {strides = array<i32>} : memref<1x8x128xf32, #tpu.memory_space<vmem>>, vector<1x8x128xf32>,
      %c0_30 = arith.constant 0 : index
      %c0_31 = arith.constant 0 : index
      %51 = vector.load %arg9[%c0_30, %c0_31] : memref<24x1xf32, #tpu.memory_space<vmem>>, vector<24x1xf32>
      %52 = vector.shape_cast %51 : vector<24x1xf32> to vector<1x24x1xf32>
      %cst_32 = arith.constant dense<0.000000e+00> : vector<1xf32>
      %53 = vector.multi_reduction <add>, %52, %cst_32 [1, 2] : vector<1x24x1xf32> to vector<1xf32>
      %54 = vector.shape_cast %53 : vector<1xf32> to vector<1x1x1xf32>
      %55 = vector.extract %54[0, 0, 0] : f32 from vector<1x1x1xf32>
      %56 = vector.broadcast %55 : f32 to vector<1x8x128xf32>
      %c0_33 = arith.constant 0 : index
      %c0_34 = arith.constant 0 : index
      %c0_35 = arith.constant 0 : index
      %57 = vector.load %arg7[%c0_33, %c0_34, %c0_35] : memref<1x8x128xf32, #tpu.memory_space<vmem>>, vector<1x8x128xf32>
      tpu.vector_store %arg7[%c0_33, %c0_34, %c0_35], %56 {strides = array<i32>} : memref<1x8x128xf32, #tpu.memory_space<vmem>>, vector<1x8x128xf32>,
    } else {
    }
    return
  }
  func.func @transform_0(%arg0: i32, %arg1: i32) -> (i32, i32) {
    %c1_i32 = arith.constant 1 : i32
    %0 = arith.muli %arg0, %c1_i32 : i32
    %1 = arith.addi %0, %arg1 : i32
    %c0_i32 = arith.constant 0 : i32
    %c0_i32_0 = arith.constant 0 : i32
    return %1, %c0_i32 : i32, i32
  }
  func.func @transform_1(%arg0: i32, %arg1: i32) -> (i32, i32) {
    %c1_i32 = arith.constant 1 : i32
    %0 = arith.muli %arg0, %c1_i32 : i32
    %1 = arith.addi %0, %arg1 : i32
    %c0_i32 = arith.constant 0 : i32
    %c0_i32_0 = arith.constant 0 : i32
    return %1, %c0_i32 : i32, i32
  }
  func.func @transform_2(%arg0: i32, %arg1: i32) -> (i32, i32) {
    %c1_i32 = arith.constant 1 : i32
    %0 = arith.muli %arg0, %c1_i32 : i32
    %1 = arith.addi %0, %arg1 : i32
    %c0_i32 = arith.constant 0 : i32
    %c0_i32_0 = arith.constant 0 : i32
    return %1, %c0_i32 : i32, i32
  }
  func.func @transform_3(%arg0: i32, %arg1: i32) -> (i32, i32) {
    %c0_i32 = arith.constant 0 : i32
    %c0_i32_0 = arith.constant 0 : i32
    %c0_i32_1 = arith.constant 0 : i32
    return %c0_i32, %c0_i32_0 : i32, i32
  }
  func.func @transform_4(%arg0: i32, %arg1: i32) -> (i32, i32, i32) {
    %c0_i32 = arith.constant 0 : i32
    %c0_i32_0 = arith.constant 0 : i32
    %c0_i32_1 = arith.constant 0 : i32
    return %arg0, %c0_i32, %c0_i32_0 : i32, i32, i32
  }
  func.func @transform_5(%arg0: i32, %arg1: i32) -> (i32, i32, i32) {
    %c0_i32 = arith.constant 0 : i32
    %c0_i32_0 = arith.constant 0 : i32
    %c0_i32_1 = arith.constant 0 : i32
    return %arg0, %c0_i32, %c0_i32_0 : i32, i32, i32
  }
}

</mosaic_0001>

<llo_original>
// kernel: tpu_custom_call.1
$region0: #{tpu_custom_call.1}
  #allocation0 [shape = 'u32[]', space=smem, size = 0x4, offset = 0x4, fixed_abs, tag = 'smem constant byte address 0x4 - core index']
  #allocation1 [shape = 'u32[144,128]{1,0:T(1,128)}', space=vmem, size = 0x12000, scoped, tag = 'internal scratch']
  #allocation2 [shape = 'f32[24,1]{1,0:T(8,128)}', space=vmem, size = 0x3000, scoped, tag = 'scratch operand']
  #allocation3 [shape = 'f32[24,1]{1,0:T(8,128)}', space=vmem, size = 0x3000, scoped, tag = 'scratch operand']
  %s0 = inlined_call_operand.vmem [shape: f32[24,128], index: 0, kind: input, shape index: {}]
  %s1 = inlined_call_operand.vmem [shape: s32[24,1], index: 1, kind: input, shape index: {}]
  %s2 = inlined_call_operand.vmem [shape: f32[24,1], index: 2, kind: input, shape index: {}]
  %s3 = inlined_call_operand.vmem [shape: f32[1,128], index: 3, kind: input, shape index: {}]
  %s4 = inlined_call_operand.hbm [shape: f32[1,8,128], index: 4, kind: output, shape index: {0}]
  %s5 = inlined_call_operand.hbm [shape: f32[1,8,128], index: 5, kind: output, shape index: {1}]
  %6 = xla_tuple %s4, %s5
  %s7 = sld [smem:[#allocation0]]
  $region42: #{tpu_custom_call.1} parent=0
    _
  %s9 = ssub.s32 1, %s7
  %s10 = scalar_select 0, %s9, %s7
  $region1: #{tpu_custom_call.1} parent=0
    #allocation4 [shape = 'u8[4096]{0}', space=vmem, size = 0x1000, scoped, tag = 'output window, operand 0, single buffered']
    #allocation5 [shape = 's32[1]{0}', space=sflag, size = 0x4, scoped, tag = 'scoped memory for tpu_custom_call.1']
    #allocation6 [shape = 'u8[4096]{0}', space=vmem, size = 0x1000, scoped, tag = 'output window, operand 1, single buffered']
    #allocation7 [shape = 's32[1]{0}', space=sflag, size = 0x4, scoped, tag = 'scoped memory for tpu_custom_call.1']
    %11 = vsyncpa [#allocation5], 0
    %12 = vsyncpa [#allocation7], 0
    // Predicated region
    $region2: #{tpu_custom_call.1} parent=1 // pred_check
      _
    $region3: #{tpu_custom_call.1} parent=1 // pred_check_branch
      %14 = sbr.rel (0) target = $region5
    $region4: #{tpu_custom_call.1} parent=1 // pred_region
      %s15 = sadd.s32 0, 0
      %s16 = smul.u32 3, %s15
      %p17 = scmp.lt.s32.totalorder %s16, 2
      %s18 = scalar_select %p17, %s16, 2
      %s19 = smul.addr %s18, 8
      %s20 = scalar_lea.vmem %s0, %s19
      %s21 = sadd.s32 0, 0
      %s22 = smul.u32 3, %s21
    $region5: #{tpu_custom_call.1} parent=1 // pred_fallthru
      _
    // Predicated region
    $region6: #{tpu_custom_call.1} parent=1 // pred_check
      _
    $region7: #{tpu_custom_call.1} parent=1 // pred_check_branch
      %24 = sbr.rel (0) target = $region9
    $region8: #{tpu_custom_call.1} parent=1 // pred_region
      %s25 = sadd.s32 0, 0
      %s26 = smul.u32 3, %s25
      %p27 = scmp.lt.s32.totalorder %s26, 2
      %s28 = scalar_select %p27, %s26, 2
      %s29 = smul.addr %s28, 8
      %s30 = scalar_lea.vmem %s1, %s29
      %s31 = sadd.s32 0, 0
      %s32 = smul.u32 3, %s31
    $region9: #{tpu_custom_call.1} parent=1 // pred_fallthru
      _
    // Predicated region
    $region10: #{tpu_custom_call.1} parent=1 // pred_check
      _
    $region11: #{tpu_custom_call.1} parent=1 // pred_check_branch
      %34 = sbr.rel (0) target = $region13
    $region12: #{tpu_custom_call.1} parent=1 // pred_region
      %s35 = sadd.s32 0, 0
      %s36 = smul.u32 3, %s35
      %p37 = scmp.lt.s32.totalorder %s36, 2
      %s38 = scalar_select %p37, %s36, 2
      %s39 = smul.addr %s38, 8
      %s40 = scalar_lea.vmem %s2, %s39
      %s41 = sadd.s32 0, 0
      %s42 = smul.u32 3, %s41
    $region13: #{tpu_custom_call.1} parent=1 // pred_fallthru
      _
    // Predicated region
    $region14: #{tpu_custom_call.1} parent=1 // pred_check
      _
    $region15: #{tpu_custom_call.1} parent=1 // pred_check_branch
      %44 = sbr.rel (0) target = $region17
    $region16: #{tpu_custom_call.1} parent=1 // pred_region
      _
    $region17: #{tpu_custom_call.1} parent=1 // pred_fallthru
      _
    %s45 = sadd.s32 0, 0
    %s46 = smul.u32 3, %s45
    %p47 = scmp.lt.s32.totalorder %s46, 2
    %s48 = scalar_select %p47, %s46, 2
    %s49 = smul.addr %s48, 8
    %s50 = scalar_lea.vmem %s0, %s49
    %s51 = sadd.s32 0, 0
    %s52 = smul.u32 3, %s51
    %p53 = scmp.lt.s32.totalorder %s52, 2
    %s54 = scalar_select %p53, %s52, 2
    %s55 = smul.addr %s54, 8
    %s56 = scalar_lea.vmem %s1, %s55
    %s57 = sadd.s32 0, 0
    %s58 = smul.u32 3, %s57
    %p59 = scmp.lt.s32.totalorder %s58, 2
    %s60 = scalar_select %p59, %s58, 2
    %s61 = smul.addr %s60, 8
    %s62 = scalar_lea.vmem %s2, %s61
    %s63 = sadd.s32 0, 0
    %s64 = smul.u32 3, %s63
    %p65 = scmp.lt.s32.totalorder %s64, 2
    %s66 = scalar_select %p65, %s64, 2
    %s67 = smul.addr %s66, 8
    %s68 = scalar_lea.vmem %s0, %s67
    %s69 = sadd.s32 0, 0
    %s70 = smul.u32 3, %s69
    %s71 = sadd.s32 0, 0
    %s72 = smul.u32 3, %s71
    %p73 = scmp.lt.s32.totalorder %s72, 2
    %s74 = scalar_select %p73, %s72, 2
    %s75 = smul.addr %s74, 8
    %s76 = scalar_lea.vmem %s1, %s75
    %s77 = sadd.s32 0, 0
    %s78 = smul.u32 3, %s77
    %s79 = sadd.s32 0, 0
    %s80 = smul.u32 3, %s79
    %p81 = scmp.lt.s32.totalorder %s80, 2
    %s82 = scalar_select %p81, %s80, 2
    %s83 = smul.addr %s82, 8
    %s84 = scalar_lea.vmem %s2, %s83
    %s85 = sadd.s32 0, 0
    %s86 = smul.u32 3, %s85
    %p87 = scmp.eq.s32.totalorder 0, 0
    // Predicated region
    $region18: #{tpu_custom_call.1} parent=1 // pred_check
      %p88 = pneg %p87
    $region19: #{tpu_custom_call.1} parent=1 // pred_check_branch
      %90 = sbr.rel (%p88) target = $region21
    $region20: #{tpu_custom_call.1} parent=1 // pred_region
      %vm91 = vcmask 7168
      %92 = vst.msk [vmem:[#allocation2] sm:$0xff] %vm91, 0.0
      %93 = vst.msk [vmem:[#allocation2 + $0x8] sm:$0xff] %vm91, 0.0
      %94 = vst.msk [vmem:[#allocation2 + $0x10] sm:$0xff] %vm91, 0.0
      %95 = vst.msk [vmem:[#allocation3] sm:$0xff] %vm91, 0.0
      %96 = vst.msk [vmem:[#allocation3 + $0x8] sm:$0xff] %vm91, 0.0
      %97 = vst.msk [vmem:[#allocation3 + $0x10] sm:$0xff] %vm91, 0.0
    $region21: #{tpu_custom_call.1} parent=1 // pred_fallthru
      _
    %v98 = vld [vmem:[%s68] sm:$0xff]
    %v99 = vld [vmem:[%s68 + $0x8] sm:$0xff]
    %v100 = vld [vmem:[%s68 + $0x10] sm:$0xff]
    %v101 = vld [vmem:[%s76] sm:$0xff]
    %v102 = vld [vmem:[%s76 + $0x8] sm:$0xff]
    %v103 = vld [vmem:[%s76 + $0x10] sm:$0xff]
    %v104 = vld [vmem:[%s84] sm:$0xff]
    %v105 = vld [vmem:[%s84 + $0x8] sm:$0xff]
    %v106 = vld [vmem:[%s84 + $0x10] sm:$0xff]
    %v107 = vld [vmem:[%s3] sm:$0x1]
    %v108 = vlaneseq
    %v109 = vand.u32 %v108, 127
    %110 = vset.pattern.permute.xlu0 0
    %111 = vperm.xlu0 %110, %v101
    %v112 = vpop.permute.xlu0 %111
    %113 = vset.pattern.permute.xlu0 0
    %114 = vperm.xlu0 %113, %v102
    %v115 = vpop.permute.xlu0 %114
    %116 = vset.pattern.permute.xlu0 0
    %117 = vperm.xlu0 %116, %v103
    %v118 = vpop.permute.xlu0 %117
    %vm119 = vcmp.eq.s32.totalorder %v109, %v112
    %vm120 = vcmp.eq.s32.totalorder %v109, %v115
    %vm121 = vcmp.eq.s32.totalorder %v109, %v118
    %v123 = vlaneseq
    %v124 = vshrl.u32 %v123, 7
    %v125 = vsub.s32 0, %v124
    %v126 = vrot.slane %v107, %v125
    %v128 = vsel %vm119, %v126, 0.0
    %v129 = vsel %vm120, %v126, 0.0
    %v130 = vsel %vm121, %v126, 0.0
    %v131 = vsub.f32 %v98, %v128
    %v132 = vsub.f32 %v99, %v129
    %v133 = vsub.f32 %v100, %v130
    %v134 = vsel %vm119, %v131, 0.0
    %v135 = vsel %vm120, %v132, 0.0
    %v136 = vsel %vm121, %v133, 0.0
    %137 = vadd.xlane.f32.xlu0 %v134
    %v138 = vpop.xlane.xlu0 %137
    %139 = vadd.xlane.f32.xlu0 %v135
    %v140 = vpop.xlane.xlu0 %139
    %141 = vadd.xlane.f32.xlu0 %v136
    %v142 = vpop.xlane.xlu0 %141
    %v143 = vmul.f32 %v131, 30.0
    %v144 = vmul.f32 %v132, 30.0
    %v145 = vmul.f32 %v133, 30.0
    %146 = vmax.xlane.f32.xlu0 %v143
    %v147 = vpop.xlane.xlu0 %146
    %148 = vmax.xlane.f32.xlu0 %v144
    %v149 = vpop.xlane.xlu0 %148
    %150 = vmax.xlane.f32.xlu0 %v145
    %v151 = vpop.xlane.xlu0 %150
    %v152 = vsub.f32 %v143, %v147
    %v153 = vsub.f32 %v144, %v149
    %v154 = vsub.f32 %v145, %v151
    %v155 = vmul.f32 %v152, 1.442695
    %v156 = vpow.pop %v155
    %v157 = vmul.f32 %v153, 1.442695
    %v158 = vpow.pop %v157
    %v159 = vmul.f32 %v154, 1.442695
    %v160 = vpow.pop %v159
    %161 = vadd.xlane.f32.xlu0 %v156
    %v162 = vpop.xlane.xlu0 %161
    %163 = vadd.xlane.f32.xlu0 %v158
    %v164 = vpop.xlane.xlu0 %163
    %165 = vadd.xlane.f32.xlu0 %v160
    %v166 = vpop.xlane.xlu0 %165
    %v167 = vlog2.pop %v162
    %v168 = vmul.f32 %v167, 0.6931472
    %v169 = vlog2.pop %v164
    %v170 = vmul.f32 %v169, 0.6931472
    %v171 = vlog2.pop %v166
    %v172 = vmul.f32 %v171, 0.6931472
    %v173 = vadd.f32 %v168, %v147
    %v174 = vadd.f32 %v170, %v149
    %v175 = vadd.f32 %v172, %v151
    %v176 = vmul.f32 %v138, 30.0
    %v177 = vmul.f32 %v140, 30.0
    %v178 = vmul.f32 %v142, 30.0
    %v179 = vsub.f32 %v173, %v176
    %v180 = vsub.f32 %v174, %v177
    %v181 = vsub.f32 %v175, %v178
    %v182 = vld [vmem:[#allocation2] sm:$0xff]
    %v183 = vld [vmem:[#allocation2 + $0x8] sm:$0xff]
    %v184 = vld [vmem:[#allocation2 + $0x10] sm:$0xff]
    %v185 = vmul.f32 %v179, %v104
    %v186 = vmul.f32 %v180, %v105
    %v187 = vmul.f32 %v181, %v106
    %v188 = vadd.f32 %v182, %v185
    %v189 = vadd.f32 %v183, %v186
    %v190 = vadd.f32 %v184, %v187
    %vm191 = vcmask 7168
    %192 = vst.msk [vmem:[#allocation2] sm:$0xff] %vm191, %v188
    %193 = vst.msk [vmem:[#allocation2 + $0x8] sm:$0xff] %vm191, %v189
    %194 = vst.msk [vmem:[#allocation2 + $0x10] sm:$0xff] %vm191, %v190
    %v195 = vld [vmem:[#allocation3] sm:$0xff]
    %v196 = vld [vmem:[#allocation3 + $0x8] sm:$0xff]
    %v197 = vld [vmem:[#allocation3 + $0x10] sm:$0xff]
    %v198 = vadd.f32 %v195, %v104
    %v199 = vadd.f32 %v196, %v105
    %v200 = vadd.f32 %v197, %v106
    %201 = vst.msk [vmem:[#allocation3] sm:$0xff] %vm191, %v198
    %202 = vst.msk [vmem:[#allocation3 + $0x8] sm:$0xff] %vm191, %v199
    %203 = vst.msk [vmem:[#allocation3 + $0x10] sm:$0xff] %vm191, %v200
    // Predicated region
    $region22: #{tpu_custom_call.1} parent=1 // pred_check
      %p204 = pneg %p87
    $region23: #{tpu_custom_call.1} parent=1 // pred_check_branch
      %206 = sbr.rel (%p204) target = $region25
    $region24: #{tpu_custom_call.1} parent=1 // pred_region
      %v207 = vld [vmem:[#allocation2] sm:$0xff]
      %v208 = vld [vmem:[#allocation2 + $0x8] sm:$0xff]
      %v209 = vld [vmem:[#allocation2 + $0x10] sm:$0xff]
      %v210 = vsel %vm191, %v207, 0.0
      %v211 = vsel %vm191, %v208, 0.0
      %v212 = vadd.f32 %v210, %v211
      %v213 = vsel %vm191, %v209, 0.0
      %v214 = vadd.f32 %v212, %v213
      %215 = vadd.xlane.f32.xlu0 %v214
      %v216 = vpop.xlane.xlu0 %215
      %v217 = vrot.slane %v216, 4
      %v218 = vadd.f32 %v216, %v217
      %v219 = vrot.slane %v218, 2
      %v220 = vadd.f32 %v218, %v219
      %v221 = vrot.slane %v220, 1
      %v222 = vadd.f32 %v220, %v221
      %s223 = vtos %v222
      %v224 = vstv %s223
      %225 = vst [vmem:[#allocation4] sm:$0xff] %v224
      %v226 = vld [vmem:[#allocation3] sm:$0xff]
      %v227 = vld [vmem:[#allocation3 + $0x8] sm:$0xff]
      %v228 = vld [vmem:[#allocation3 + $0x10] sm:$0xff]
      %v229 = vsel %vm191, %v226, 0.0
      %v230 = vsel %vm191, %v227, 0.0
      %v231 = vadd.f32 %v229, %v230
      %v232 = vsel %vm191, %v228, 0.0
      %v233 = vadd.f32 %v231, %v232
      %234 = vadd.xlane.f32.xlu0 %v233
      %v235 = vpop.xlane.xlu0 %234
      %v236 = vrot.slane %v235, 4
      %v237 = vadd.f32 %v235, %v236
      %v238 = vrot.slane %v237, 2
      %v239 = vadd.f32 %v237, %v238
      %v240 = vrot.slane %v239, 1
      %v241 = vadd.f32 %v239, %v240
      %s242 = vtos %v241
      %v243 = vstv %s242
      %244 = vst [vmem:[#allocation6] sm:$0xff] %v243
    $region25: #{tpu_custom_call.1} parent=1 // pred_fallthru
      _
    // Predicated region
    $region26: #{tpu_custom_call.1} parent=1 // pred_check
      _
    $region27: #{tpu_custom_call.1} parent=1 // pred_check_branch
      %246 = sbr.rel (0) target = $region29
    $region28: #{tpu_custom_call.1} parent=1 // pred_region
      %s248 = ssub.s32 128, 128
      %249 = vsyncadd [#allocation5], %s248
      %s251 = sshll.u32 [#allocation4], 4
      %s252 = int_to_ptr.vmem [resolvable:$true] %s251
      %254 = dma.vmem_to_hbm [thread:$0]  %s252, 128, %s4, [#allocation5]
    $region29: #{tpu_custom_call.1} parent=1 // pred_fallthru
      _
    // Predicated region
    $region30: #{tpu_custom_call.1} parent=1 // pred_check
      _
    $region31: #{tpu_custom_call.1} parent=1 // pred_check_branch
      %256 = sbr.rel (0) target = $region33
    $region32: #{tpu_custom_call.1} parent=1 // pred_region
      %s258 = ssub.s32 128, 128
      %259 = vsyncadd [#allocation7], %s258
      %s261 = sshll.u32 [#allocation6], 4
      %s262 = int_to_ptr.vmem [resolvable:$true] %s261
      %264 = dma.vmem_to_hbm [thread:$0]  %s262, 128, %s5, [#allocation7]
    $region33: #{tpu_custom_call.1} parent=1 // pred_fallthru
      _
    // Predicated region
    $region34: #{tpu_custom_call.1} parent=1 // pred_check
      _
    $region35: #{tpu_custom_call.1} parent=1 // pred_check_branch
      %266 = sbr.rel (0) target = $region37
    $region36: #{tpu_custom_call.1} parent=1 // pred_region
      %267 = dma.done [#allocation5], 128
    $region37: #{tpu_custom_call.1} parent=1 // pred_fallthru
      _
    // Predicated region
    $region38: #{tpu_custom_call.1} parent=1 // pred_check
      _
    $region39: #{tpu_custom_call.1} parent=1 // pred_check_branch
      %269 = sbr.rel (0) target = $region41
    $region40: #{tpu_custom_call.1} parent=1 // pred_region
      %270 = dma.done [#allocation7], 128
    $region41: #{tpu_custom_call.1} parent=1 // pred_fallthru
      _
    %271 = vsyncpa [#allocation5], 1
    %272 = vsyncpa [#allocation7], 1

</llo_original>
